<compile_context>
chip_gen: v5e
topology: v5e:2x2
jax: 0.10.0
libtpu: 0.0.40
codegen_flags: <defaults>
</compile_context>

<pallas_src>
import functools

import jax
import jax.numpy as jnp
from jax import lax
from jax.experimental import pallas as pl
from jax.experimental.pallas import tpu as pltpu


def _vq_kernel(z_ref, emb_ref, esq_ref, zq_ref, counts_ref, *,
               n_rows, tile_n, mask_tail):
    """One grid step processes a tile of rows of z against the full codebook.

    z_ref      : (tile_n, e_dim)   VMEM input tile
    emb_ref    : (n_e,   e_dim)    VMEM (full codebook; constant block index,
                                   so it is not re-fetched across grid steps)
    esq_ref    : (1, n_e) f32      VMEM (precomputed ||e||^2, constant block)
    zq_ref     : (tile_n, e_dim)   VMEM output tile
    counts_ref : (1, 1, n_e) f32   VMEM output block (per-tile code histogram)
    """
    z = z_ref[...].astype(jnp.float32)          # (tile_n, e_dim)
    e = emb_ref[...].astype(jnp.float32)        # (n_e, e_dim)
    e_sq = esq_ref[...]                         # (1, n_e)

    # d = ||e||^2 - 2 z e^T   (||z||^2 is constant per row -> argmin-invariant,
    # so it is dropped; ||e||^2 is loop-invariant and precomputed outside).
    # Contract over e_dim directly so no codebook transpose is materialized.
    # NOTE: kept in f32 -- a bf16 distance matmul could flip argmin on ties.
    ze = lax.dot_general(z, e, (((1,), (1,)), ((), ())),
                         preferred_element_type=jnp.float32)    # (tile_n, n_e)
    d = e_sq - 2.0 * ze

    # argmin over codes (first-min tie-break, same as torch.argmin), then
    # one-hot encodings exactly as torch.scatter_.
    idx = jnp.argmin(d, axis=1)                                 # (tile_n,)
    code_iota = lax.broadcasted_iota(jnp.int32, d.shape, 1)     # (tile_n, n_e)
    one_hot = (code_iota == idx[:, None]).astype(jnp.float32)

    # z_q = one_hot @ E  (same arithmetic as torch.matmul(min_encodings, W)).
    zq = jnp.dot(one_hot, e, preferred_element_type=jnp.float32)

    # Straight-through forward value: z + (z_q - z)  (matches torch fp order).
    zq_ref[...] = (z + (zq - z)).astype(zq_ref.dtype)

    # Per-tile code-usage histogram; padded remainder rows are masked out so
    # the wrapper-side perplexity matches the unpadded batch exactly.
    if mask_tail:
        row = (pl.program_id(0) * tile_n
               + lax.broadcasted_iota(jnp.int32, (tile_n, 1), 0))
        one_hot = jnp.where(row < n_rows, one_hot, 0.0)
    counts_ref[...] = jnp.sum(one_hot, axis=0)[None, None, :]


@functools.partial(jax.jit, static_argnames=("tile_n",))
def vector_quantizer_forward(z, embedding, *, tile_n=512):
    """Pallas implementation of VectorQuantizerRestart.forward.

    z         : (N, e_dim) float32 (flattened encoder output, N = B*H*W)
    embedding : (n_e, e_dim) float32 codebook
    returns   : (z_q, perplexity)
    """
    n, e_dim = z.shape
    n_e, _ = embedding.shape

    # Pad the row dimension up to a multiple of tile_n (remainder tile).
    num_tiles = pl.cdiv(n, tile_n)
    n_pad = num_tiles * tile_n
    z_p = jnp.pad(z, ((0, n_pad - n), (0, 0))) if n_pad != n else z

    # Loop-invariant ||e||^2: computed once here instead of once per grid step.
    e32 = embedding.astype(jnp.float32)
    e_sq = jnp.sum(e32 * e32, axis=1)[None, :]                  # (1, n_e)

    kernel = functools.partial(
        _vq_kernel, n_rows=n, tile_n=tile_n, mask_tail=(n_pad != n))

    # TODO(synk): for n_e >= 4096 the (tile_n, n_e) intermediates should also
    # be blocked over the code dimension (running min / argmin carry).
    z_q_pad, counts_blocks = pl.pallas_call(
        kernel,
        out_shape=(
            jax.ShapeDtypeStruct((n_pad, e_dim), z.dtype),
            jax.ShapeDtypeStruct((num_tiles, 1, n_e), jnp.float32),
        ),
        grid_spec=pltpu.PrefetchScalarGridSpec(
            num_scalar_prefetch=0,
            grid=(num_tiles,),
            in_specs=[
                pl.BlockSpec((tile_n, e_dim), lambda i: (i, 0)),
                pl.BlockSpec((n_e, e_dim), lambda i: (0, 0)),
                pl.BlockSpec((1, n_e), lambda i: (0, 0)),
            ],
            out_specs=[
                pl.BlockSpec((tile_n, e_dim), lambda i: (i, 0)),
                pl.BlockSpec((1, 1, n_e), lambda i: (i, 0, 0)),
            ],
        ),
        compiler_params=pltpu.CompilerParams(
            # No cross-step state -> the row-tile axis can be sharded across
            # TensorCores (v7x megacore win; harmless on v5e/v6e).
            dimension_semantics=("parallel",),
            # Headroom above v5e's 16 MiB scoped default while staying within
            # v7x's 64 MiB physical VMEM.
            vmem_limit_bytes=48 * 1024 * 1024,
        ),
    )(z_p, embedding, e_sq)

    z_q = z_q_pad[:n]

    # Histogram reduction + perplexity: tiny, done in plain XLA.
    counts = jnp.sum(counts_blocks, axis=(0, 1))                # (n_e,)
    e_mean = counts / n
    perplexity = jnp.exp(-jnp.sum(e_mean * jnp.log(e_mean + 1e-10)))
    return z_q, perplexity


def _reference_forward(z, embedding):
    """Pure-JAX reference mirroring the PyTorch forward()."""
    d = (jnp.sum(z ** 2, axis=1, keepdims=True)
         + jnp.sum(embedding ** 2, axis=1)
         - 2.0 * z @ embedding.T)
    idx = jnp.argmin(d, axis=1)
    one_hot = jax.nn.one_hot(idx, embedding.shape[0], dtype=z.dtype)
    z_q = one_hot @ embedding
    z_q = z + (z_q - z)
    e_mean = jnp.mean(one_hot, axis=0)
    perplexity = jnp.exp(-jnp.sum(e_mean * jnp.log(e_mean + 1e-10)))
    return z_q, perplexity


if __name__ == "__main__":
    # Small synthetic config (module defaults are n_e=1024, e_dim=256).
    n_e, e_dim = 256, 128
    batch, height, width = 2, 10, 16          # N = B*H*W = 320 rows
    n_rows = batch * height * width

    key = jax.random.PRNGKey(0)
    k_emb, k_z = jax.random.split(key)

    # Deterministic codebook init (nn.Embedding default: N(0, 1)).
    # TODO(synk): the real module loads 'ET/logs/codebook_{n_e}.pt'; synthetic init here.
    embedding = jax.random.normal(k_emb, (n_e, e_dim), dtype=jnp.float32)

    # Encoder output, already flattened to (N, e_dim) as forward() expects.
    z = jax.random.normal(k_z, (n_rows, e_dim), dtype=jnp.float32)

    # tile_n=128 at this small test size exercises a multi-step grid plus the
    # padded remainder tile; the production default is tile_n=512.
    z_q, perplexity = vector_quantizer_forward(z, embedding, tile_n=128)
    jax.block_until_ready((z_q, perplexity))

    # TODO(synk): usage-buffer update / prints ('code num', 'usage') are host-side
    # side effects in the PyTorch module and are not part of the kernel outputs.

    z_q_ref, perp_ref = _reference_forward(z, embedding)
    assert z_q.shape == (n_rows, e_dim)
    assert jnp.allclose(z_q, z_q_ref, atol=1e-5, rtol=1e-5)
    assert jnp.allclose(perplexity, perp_ref, atol=1e-5, rtol=1e-5)

    print("KERNEL_OK")
</pallas_src>

<mosaic_0001>
module attributes {stable_mosaic.version = 11 : i64} {
  func.func @_vq_kernel(%arg0: i32, %arg1: memref<128x128xf32, #tpu.memory_space<vmem>>, %arg2: memref<256x128xf32, #tpu.memory_space<vmem>>, %arg3: memref<1x256xf32, #tpu.memory_space<vmem>>, %arg4: memref<128x128xf32, #tpu.memory_space<vmem>>, %arg5: memref<1x1x256xf32, #tpu.memory_space<vmem>>) attributes {dimension_semantics = [#tpu.dimension_semantics<parallel>], iteration_bounds = array<i64: 3>, scalar_prefetch = 0 : i64, scratch_operands = 0 : i64, tpu.core_type = #tpu.core_type<tc>, window_params = [{transform_indices = @transform_0, window_bounds = array<i64: 128, 128>}, {pipeline_mode = #tpu.pipeline_mode<synchronous>, transform_indices = @transform_1, window_bounds = array<i64: 256, 128>}, {pipeline_mode = #tpu.pipeline_mode<synchronous>, transform_indices = @transform_2, window_bounds = array<i64: 1, 256>}, {transform_indices = @transform_3, window_bounds = array<i64: 128, 128>}, {transform_indices = @transform_4, window_bounds = array<i64: 1, 1, 256>}]} {
    %c0 = arith.constant 0 : index
    %c0_0 = arith.constant 0 : index
    %0 = vector.load %arg1[%c0, %c0_0] : memref<128x128xf32, #tpu.memory_space<vmem>>, vector<128x128xf32>
    %c0_1 = arith.constant 0 : index
    %c0_2 = arith.constant 0 : index
    %1 = vector.load %arg2[%c0_1, %c0_2] : memref<256x128xf32, #tpu.memory_space<vmem>>, vector<256x128xf32>
    %c0_3 = arith.constant 0 : index
    %c0_4 = arith.constant 0 : index
    %2 = vector.load %arg3[%c0_3, %c0_4] : memref<1x256xf32, #tpu.memory_space<vmem>>, vector<1x256xf32>
    %cst = arith.constant dense<0.000000e+00> : vector<128x256xf32>
    %3 = tpu.matmul %0, %1, %cst {dimension_numbers = #tpu.dot_dimension_numbers<[1], [1], [0], [0], [0, 0, 1, 0], [], []>} : vector<128x128xf32>, vector<256x128xf32>, vector<128x256xf32> -> vector<128x256xf32>
    %cst_5 = arith.constant 2.000000e+00 : f32
    %4 = vector.broadcast %cst_5 : f32 to vector<128x256xf32>
    %5 = arith.mulf %4, %3 : vector<128x256xf32>
    %6 = vector.broadcast %2 : vector<1x256xf32> to vector<128x256xf32>
    %7 = arith.subf %6, %5 : vector<128x256xf32>
    %8 = tpu.reduce_index %7 {axis = 1 : i32, kind = #tpu.reduction_kind<arg_min>} : vector<128x256xf32> -> vector<128xi32>
    %9 = tpu.iota {dimensions = array<i32: 1>} : vector<128x256xi32>
    %10 = vector.shape_cast %8 : vector<128xi32> to vector<128x1xi32>
    %11 = vector.broadcast %10 : vector<128x1xi32> to vector<128x256xi32>
    %12 = arith.cmpi eq, %9, %11 : vector<128x256xi32>
    %13 = arith.extui %12 : vector<128x256xi1> to vector<128x256xi32>
    %14 = arith.sitofp %13 : vector<128x256xi32> to vector<128x256xf32>
    %cst_6 = arith.constant dense<0.000000e+00> : vector<128x128xf32>
    %15 = tpu.matmul %14, %1, %cst_6 {dimension_numbers = #tpu.dot_dimension_numbers<[1], [0], [0], [1], [0, 0, 1, 1], [], []>} : vector<128x256xf32>, vector<256x128xf32>, vector<128x128xf32> -> vector<128x128xf32>
    %16 = arith.subf %15, %0 : vector<128x128xf32>
    %17 = arith.addf %0, %16 : vector<128x128xf32>
    %c0_7 = arith.constant 0 : index
    %c0_8 = arith.constant 0 : index
    %18 = vector.load %arg4[%c0_7, %c0_8] : memref<128x128xf32, #tpu.memory_space<vmem>>, vector<128x128xf32>
    tpu.vector_store %arg4[%c0_7, %c0_8], %17 {strides = array<i32>} : memref<128x128xf32, #tpu.memory_space<vmem>>, vector<128x128xf32>,
    %c128_i32 = arith.constant 128 : i32
    %19 = arith.muli %arg0, %c128_i32 : i32
    %20 = tpu.iota {dimensions = array<i32: 0>} : vector<128x1xi32>
    %21 = vector.broadcast %19 : i32 to vector<128x1xi32>
    %22 = arith.addi %21, %20 : vector<128x1xi32>
    %c320_i32 = arith.constant 320 : i32
    %23 = vector.broadcast %c320_i32 : i32 to vector<128x1xi32>
    %24 = arith.cmpi slt, %22, %23 : vector<128x1xi32>
    %cst_9 = arith.constant 0.000000e+00 : f32
    %25 = vector.shape_cast %24 : vector<128x1xi1> to vector<128x1xi1>
    %26 = vector.broadcast %25 : vector<128x1xi1> to vector<128x256xi1>
    %27 = vector.broadcast %cst_9 : f32 to vector<128x256xf32>
    %28 = arith.select %26, %14, %27 : vector<128x256xi1>, vector<128x256xf32>
    %cst_10 = arith.constant dense<0.000000e+00> : vector<256xf32>
    %29 = vector.multi_reduction <add>, %28, %cst_10 [0] : vector<128x256xf32> to vector<256xf32>
    %30 = vector.shape_cast %29 : vector<256xf32> to vector<1x1x256xf32>
    %c0_11 = arith.constant 0 : index
    %c0_12 = arith.constant 0 : index
    %c0_13 = arith.constant 0 : index
    %31 = vector.load %arg5[%c0_11, %c0_12, %c0_13] : memref<1x1x256xf32, #tpu.memory_space<vmem>>, vector<1x1x256xf32>
    tpu.vector_store %arg5[%c0_11, %c0_12, %c0_13], %30 {strides = array<i32>} : memref<1x1x256xf32, #tpu.memory_space<vmem>>, vector<1x1x256xf32>,
    return
  }
  func.func @transform_0(%arg0: i32) -> (i32, i32) {
    %c0_i32 = arith.constant 0 : i32
    %c0_i32_0 = arith.constant 0 : i32
    return %arg0, %c0_i32 : i32, i32
  }
  func.func @transform_1(%arg0: i32) -> (i32, i32) {
    %c0_i32 = arith.constant 0 : i32
    %c0_i32_0 = arith.constant 0 : i32
    %c0_i32_1 = arith.constant 0 : i32
    return %c0_i32, %c0_i32_0 : i32, i32
  }
  func.func @transform_2(%arg0: i32) -> (i32, i32) {
    %c0_i32 = arith.constant 0 : i32
    %c0_i32_0 = arith.constant 0 : i32
    %c0_i32_1 = arith.constant 0 : i32
    return %c0_i32, %c0_i32_0 : i32, i32
  }
  func.func @transform_3(%arg0: i32) -> (i32, i32) {
    %c0_i32 = arith.constant 0 : i32
    %c0_i32_0 = arith.constant 0 : i32
    return %arg0, %c0_i32 : i32, i32
  }
  func.func @transform_4(%arg0: i32) -> (i32, i32, i32) {
    %c0_i32 = arith.constant 0 : i32
    %c0_i32_0 = arith.constant 0 : i32
    %c0_i32_1 = arith.constant 0 : i32
    return %arg0, %c0_i32, %c0_i32_0 : i32, i32, i32
  }
}

</mosaic_0001>

<llo_original>
// kernel: vector_quantizer_forward.1
$region0: #{vector_quantizer_forward.1}
  #allocation0 [shape = 'u32[]', space=smem, size = 0x4, offset = 0x4, fixed_abs, tag = 'smem constant byte address 0x4 - core index']
  #allocation1 [shape = 'u32[72,128]{1,0:T(1,128)}', space=vmem, size = 0x9000, scoped, tag = 'internal scratch']
  %s0 = inlined_call_operand.vmem [shape: f32[384,128], index: 0, kind: input, shape index: {}]
  %s1 = inlined_call_operand.vmem [shape: f32[256,128], index: 1, kind: input, shape index: {}]
  %s2 = inlined_call_operand.vmem [shape: f32[1,256], index: 2, kind: input, shape index: {}]
  %s3 = inlined_call_operand.vmem [shape: f32[384,128], index: 3, kind: output, shape index: {0}]
  %s4 = inlined_call_operand.vmem [shape: f32[3,1,256], index: 4, kind: output, shape index: {1}]
  %5 = xla_tuple %s3, %s4
  %s6 = sld [smem:[#allocation0]]
  $region53: #{vector_quantizer_forward.1} parent=0
    _
  %s8 = ssub.s32 1, %s6
  %s9 = scalar_select 0, %s8, %s6
  loop: start=0, step=1, limit=5
  $region2: #{vector_quantizer_forward.1} parent=0 // loop_pre_header
    _
  $region3: #{vector_quantizer_forward.1} parent=0 // loop_header
    %s11 = sphi 0, %s15
    %p12 = scmp.ge.s32.totalorder %s11, 5
    %s21 = sphi 0, %s23
    %s24 = sphi 0, %s21
    %s25 = sphi 0, %s24
    %s41 = sphi 0, %s25
    %s45 = sphi 0, %s45
    %s47 = sphi 0, %s45
    %s48 = sphi 0, %s47
    %s62 = sphi 0, %s48
    %s66 = sphi 0, %s66
    %s68 = sphi 0, %s66
    %s69 = sphi 0, %s68
    %s83 = sphi 0, %s69
    %s89 = sphi 0, %s91
    %s92 = sphi 0, %s89
    %s93 = sphi 0, %s92
    %s109 = sphi 0, %s93
    %s115 = sphi 0, %s117
    %s118 = sphi 0, %s115
    %s119 = sphi 0, %s118
    %s135 = sphi 0, %s119
  $region4: #{vector_quantizer_forward.1} parent=0 // loop_header_branch
    %14 = sbr.rel (%p12) target = $region8
  $region5: #{vector_quantizer_forward.1} parent=0 // loop_body
    %s16 = ssub.s32 %s11, 1
    %s17 = ssub.s32 %s11, 2
    %s18 = sadd.s32 %s11, 1
    %s19 = ssub.s32 %s11, %s18
    %p20 = scmp.eq.s32.totalorder %s19, 0
    %s22 = sadd.s32 %s21, 1
    %s23 = scalar_select %p20, %s21, %s22
    %p26 = pneg %p20
    %p27 = scmp.eq.s32.totalorder %s11, 2
    %p28 = por %p26, %p27
    %p29 = scmp.ne.s32.totalorder %s21, %s24
    %p30 = scmp.eq.s32.totalorder %s11, 0
    %p31 = por %p29, %p30
    %p32 = scmp.ne.s32.totalorder %s21, %s24
    %p33 = scmp.eq.s32.totalorder %s16, 2
    %p34 = por %p32, %p33
    %p35 = scmp.ne.s32.totalorder %s24, %s25
    %p36 = scmp.eq.s32.totalorder %s16, 0
    %p37 = por %p35, %p36
    %p38 = scmp.ne.s32.totalorder %s24, %s25
    %p39 = scmp.eq.s32.totalorder %s17, 2
    %p40 = por %p38, %p39
    %p42 = scmp.ne.s32.totalorder %s25, %s41
    %p43 = scmp.eq.s32.totalorder %s17, 0
    %p44 = por %p42, %p43
    %s46 = sadd.s32 %s45, 1
    %p49 = scmp.eq.s32.totalorder %s11, 2
    %p50 = scmp.ne.s32.totalorder %s45, %s47
    %p51 = scmp.eq.s32.totalorder %s11, 0
    %p52 = por %p50, %p51
    %p53 = scmp.ne.s32.totalorder %s45, %s47
    %p54 = scmp.eq.s32.totalorder %s16, 2
    %p55 = por %p53, %p54
    %p56 = scmp.ne.s32.totalorder %s47, %s48
    %p57 = scmp.eq.s32.totalorder %s16, 0
    %p58 = por %p56, %p57
    %p59 = scmp.ne.s32.totalorder %s47, %s48
    %p60 = scmp.eq.s32.totalorder %s17, 2
    %p61 = por %p59, %p60
    %p63 = scmp.ne.s32.totalorder %s48, %s62
    %p64 = scmp.eq.s32.totalorder %s17, 0
    %p65 = por %p63, %p64
    %s67 = sadd.s32 %s66, 1
    %p70 = scmp.eq.s32.totalorder %s11, 2
    %p71 = scmp.ne.s32.totalorder %s66, %s68
    %p72 = scmp.eq.s32.totalorder %s11, 0
    %p73 = por %p71, %p72
    %p74 = scmp.ne.s32.totalorder %s66, %s68
    %p75 = scmp.eq.s32.totalorder %s16, 2
    %p76 = por %p74, %p75
    %p77 = scmp.ne.s32.totalorder %s68, %s69
    %p78 = scmp.eq.s32.totalorder %s16, 0
    %p79 = por %p77, %p78
    %p80 = scmp.ne.s32.totalorder %s68, %s69
    %p81 = scmp.eq.s32.totalorder %s17, 2
    %p82 = por %p80, %p81
    %p84 = scmp.ne.s32.totalorder %s69, %s83
    %p85 = scmp.eq.s32.totalorder %s17, 0
    %p86 = por %p84, %p85
    %s87 = ssub.s32 %s11, %s18
    %p88 = scmp.eq.s32.totalorder %s87, 0
    %s90 = sadd.s32 %s89, 1
    %s91 = scalar_select %p88, %s89, %s90
    %p94 = pneg %p88
    %p95 = scmp.eq.s32.totalorder %s11, 2
    %p96 = por %p94, %p95
    %p97 = scmp.ne.s32.totalorder %s89, %s92
    %p98 = scmp.eq.s32.totalorder %s11, 0
    %p99 = por %p97, %p98
    %p100 = scmp.ne.s32.totalorder %s89, %s92
    %p101 = scmp.eq.s32.totalorder %s16, 2
    %p102 = por %p100, %p101
    %p103 = scmp.ne.s32.totalorder %s92, %s93
    %p104 = scmp.eq.s32.totalorder %s16, 0
    %p105 = por %p103, %p104
    %p106 = scmp.ne.s32.totalorder %s92, %s93
    %p107 = scmp.eq.s32.totalorder %s17, 2
    %p108 = por %p106, %p107
    %p110 = scmp.ne.s32.totalorder %s93, %s109
    %p111 = scmp.eq.s32.totalorder %s17, 0
    %p112 = por %p110, %p111
    %s113 = ssub.s32 %s11, %s18
    %p114 = scmp.eq.s32.totalorder %s113, 0
    %s116 = sadd.s32 %s115, 1
    %s117 = scalar_select %p114, %s115, %s116
    %p120 = pneg %p114
    %p121 = scmp.eq.s32.totalorder %s11, 2
    %p122 = por %p120, %p121
    %p123 = scmp.ne.s32.totalorder %s115, %s118
    %p124 = scmp.eq.s32.totalorder %s11, 0
    %p125 = por %p123, %p124
    %p126 = scmp.ne.s32.totalorder %s115, %s118
    %p127 = scmp.eq.s32.totalorder %s16, 2
    %p128 = por %p126, %p127
    %p129 = scmp.ne.s32.totalorder %s118, %s119
    %p130 = scmp.eq.s32.totalorder %s16, 0
    %p131 = por %p129, %p130
    %p132 = scmp.ne.s32.totalorder %s118, %s119
    %p133 = scmp.eq.s32.totalorder %s17, 2
    %p134 = por %p132, %p133
    %p136 = scmp.ne.s32.totalorder %s119, %s135
    %p137 = scmp.eq.s32.totalorder %s17, 0
    %p138 = por %p136, %p137
    %p139 = scmp.le.s32.totalorder 1, %s11
    %p140 = scmp.lt.s32.totalorder %s11, 4
    %p141 = pnand %p139, %p140
    %p142 = pneg %p141
    // Predicated region
    $region9: #{vector_quantizer_forward.1} parent=5 // pred_check
      _
    $region10: #{vector_quantizer_forward.1} parent=5 // pred_check_branch
      %144 = sbr.rel (%p141) target = $region12
    $region11: #{vector_quantizer_forward.1} parent=5 // pred_region
      %s145 = ssub.s32 %s11, 1
      // Predicated region
      $region13: #{vector_quantizer_forward.1} parent=11 // pred_check
        %p146 = pneg %p58
      $region14: #{vector_quantizer_forward.1} parent=11 // pred_check_branch
        %148 = sbr.rel (%p146) target = $region16
      $region15: #{vector_quantizer_forward.1} parent=11 // pred_region
        _
      $region16: #{vector_quantizer_forward.1} parent=11 // pred_fallthru
        _
      // Predicated region
      $region17: #{vector_quantizer_forward.1} parent=11 // pred_check
        %p149 = pneg %p79
      $region18: #{vector_quantizer_forward.1} parent=11 // pred_check_branch
        %151 = sbr.rel (%p149) target = $region20
      $region19: #{vector_quantizer_forward.1} parent=11 // pred_region
        _
      $region20: #{vector_quantizer_forward.1} parent=11 // pred_fallthru
        _
    $region12: #{vector_quantizer_forward.1} parent=5 // pred_fallthru
      _
    %p152 = scmp.lt.s32.totalorder %s11, 3
    // Predicated region
    $region21: #{vector_quantizer_forward.1} parent=5 // pred_check
      %p153 = pneg %p152
    $region22: #{vector_quantizer_forward.1} parent=5 // pred_check_branch
      %155 = sbr.rel (%p153) target = $region24
    $region23: #{vector_quantizer_forward.1} parent=5 // pred_region
      // Predicated region
      $region25: #{vector_quantizer_forward.1} parent=23 // pred_check
        %p156 = pneg %p31
      $region26: #{vector_quantizer_forward.1} parent=23 // pred_check_branch
        %158 = sbr.rel (%p156) target = $region28
      $region27: #{vector_quantizer_forward.1} parent=23 // pred_region
        %s159 = smul.u32 16, %s11
        %p160 = scmp.lt.s32.totalorder %s159, 47
        %s161 = scalar_select %p160, %s159, 47
        %s162 = smul.addr %s161, 8
        %s163 = scalar_lea.vmem %s0, %s162
        %s164 = smul.u32 16, %s11
      $region28: #{vector_quantizer_forward.1} parent=23 // pred_fallthru
        _
    $region24: #{vector_quantizer_forward.1} parent=5 // pred_fallthru
      _
    %p165 = scmp.le.s32.totalorder 1, %s11
    %p166 = scmp.lt.s32.totalorder %s11, 4
    %p167 = pnand %p165, %p166
    %p168 = pneg %p167
    // Predicated region
    $region29: #{vector_quantizer_forward.1} parent=5 // pred_check
      _
    $region30: #{vector_quantizer_forward.1} parent=5 // pred_check_branch
      %170 = sbr.rel (%p167) target = $region32
    $region31: #{vector_quantizer_forward.1} parent=5 // pred_region
      %s171 = ssub.s32 %s11, 1
      %s172 = smul.u32 16, %s16
      %p173 = scmp.lt.s32.totalorder %s172, 47
      %s174 = scalar_select %p173, %s172, 47
      %s175 = smul.addr %s174, 8
      %s176 = scalar_lea.vmem %s0, %s175
      %p177 = pneg %p37
      %p178 = pneg %p34
      %p179 = pneg %p58
      %p180 = pneg %p55
      %p181 = pneg %p79
      %p182 = pneg %p76
      %p183 = pneg %p105
      %p184 = pneg %p102
      %s185 = smul.u32 16, %s16
      %p186 = scmp.lt.s32.totalorder %s185, 47
      %s187 = scalar_select %p186, %s185, 47
      %s188 = smul.addr %s187, 8
      %s189 = scalar_lea.vmem %s3, %s188
      %p190 = pneg %p131
      %p191 = pneg %p128
      %p192 = scmp.lt.s32.totalorder %s16, 2
      %s193 = scalar_select %p192, %s16, 2
      %s194 = smul.addr %s193, 2
      %s195 = scalar_lea.vmem %s4, %s194
      %s196 = smul.u32 16, %s16
      %p197 = scmp.lt.s32.totalorder %s196, 47
      %s198 = scalar_select %p197, %s196, 47
      %s199 = smul.addr %s198, 8
      %s200 = scalar_lea.vmem %s0, %s199
      %s201 = smul.u32 16, %s16
      %s202 = smul.u32 16, %s16
      %p203 = scmp.lt.s32.totalorder %s202, 47
      %s204 = scalar_select %p203, %s202, 47
      %s205 = smul.addr %s204, 8
      %s206 = scalar_lea.vmem %s3, %s205
      %s207 = smul.u32 16, %s16
      %p208 = scmp.lt.s32.totalorder %s16, 2
      %s209 = scalar_select %p208, %s16, 2
      %s210 = smul.addr %s209, 2
      %s211 = scalar_lea.vmem %s4, %s210
      %v212 = vld [vmem:[%s200] sm:$0xff]
      %v213 = vld [vmem:[%s200 + $0x8] sm:$0xff]
      %v214 = vld [vmem:[%s200 + $0x10] sm:$0xff]
      %v215 = vld [vmem:[%s200 + $0x18] sm:$0xff]
      %v216 = vld [vmem:[%s200 + $0x20] sm:$0xff]
      %v217 = vld [vmem:[%s200 + $0x28] sm:$0xff]
      %v218 = vld [vmem:[%s200 + $0x30] sm:$0xff]
      %v219 = vld [vmem:[%s200 + $0x38] sm:$0xff]
      %v220 = vld [vmem:[%s200 + $0x40] sm:$0xff]
      %v221 = vld [vmem:[%s200 + $0x48] sm:$0xff]
      %v222 = vld [vmem:[%s200 + $0x50] sm:$0xff]
      %v223 = vld [vmem:[%s200 + $0x58] sm:$0xff]
      %v224 = vld [vmem:[%s200 + $0x60] sm:$0xff]
      %v225 = vld [vmem:[%s200 + $0x68] sm:$0xff]
      %v226 = vld [vmem:[%s200 + $0x70] sm:$0xff]
      %v227 = vld [vmem:[%s200 + $0x78] sm:$0xff]
      %v228 = vld [vmem:[%s1] sm:$0xff]
      %v229 = vld [vmem:[%s1 + $0x8] sm:$0xff]
      %v230 = vld [vmem:[%s1 + $0x10] sm:$0xff]
      %v231 = vld [vmem:[%s1 + $0x18] sm:$0xff]
      %v232 = vld [vmem:[%s1 + $0x20] sm:$0xff]
      %v233 = vld [vmem:[%s1 + $0x28] sm:$0xff]
      %v234 = vld [vmem:[%s1 + $0x30] sm:$0xff]
      %v235 = vld [vmem:[%s1 + $0x38] sm:$0xff]
      %v236 = vld [vmem:[%s1 + $0x40] sm:$0xff]
      %v237 = vld [vmem:[%s1 + $0x48] sm:$0xff]
      %v238 = vld [vmem:[%s1 + $0x50] sm:$0xff]
      %v239 = vld [vmem:[%s1 + $0x58] sm:$0xff]
      %v240 = vld [vmem:[%s1 + $0x60] sm:$0xff]
      %v241 = vld [vmem:[%s1 + $0x68] sm:$0xff]
      %v242 = vld [vmem:[%s1 + $0x70] sm:$0xff]
      %v243 = vld [vmem:[%s1 + $0x78] sm:$0xff]
      %v244 = vld [vmem:[%s1 + $0x80] sm:$0xff]
      %v245 = vld [vmem:[%s1 + $0x88] sm:$0xff]
      %v246 = vld [vmem:[%s1 + $0x90] sm:$0xff]
      %v247 = vld [vmem:[%s1 + $0x98] sm:$0xff]
      %v248 = vld [vmem:[%s1 + $0xa0] sm:$0xff]
      %v249 = vld [vmem:[%s1 + $0xa8] sm:$0xff]
      %v250 = vld [vmem:[%s1 + $0xb0] sm:$0xff]
      %v251 = vld [vmem:[%s1 + $0xb8] sm:$0xff]
      %v252 = vld [vmem:[%s1 + $0xc0] sm:$0xff]
      %v253 = vld [vmem:[%s1 + $0xc8] sm:$0xff]
      %v254 = vld [vmem:[%s1 + $0xd0] sm:$0xff]
      %v255 = vld [vmem:[%s1 + $0xd8] sm:$0xff]
      %v256 = vld [vmem:[%s1 + $0xe0] sm:$0xff]
      %v257 = vld [vmem:[%s1 + $0xe8] sm:$0xff]
      %v258 = vld [vmem:[%s1 + $0xf0] sm:$0xff]
      %v259 = vld [vmem:[%s1 + $0xf8] sm:$0xff]
      %v260 = vld [vmem:[%s2] sm:$0x3]
      %261 = vmatpush.xpose.msra.mxu0 %v243
      %262 = vmatpush.xpose.msra.mxu0 %v242
      %263 = vmatpush.xpose.msra.mxu0 %v241
      %264 = vmatpush.xpose.msra.mxu0 %v240
      %265 = vmatpush.xpose.msra.mxu0 %v239
      %266 = vmatpush.xpose.msra.mxu0 %v238
      %267 = vmatpush.xpose.msra.mxu0 %v237
      %268 = vmatpush.xpose.msra.mxu0 %v236
      %269 = vmatpush.xpose.msra.mxu0 %v235
      %270 = vmatpush.xpose.msra.mxu0 %v234
      %271 = vmatpush.xpose.msra.mxu0 %v233
      %272 = vmatpush.xpose.msra.mxu0 %v232
      %273 = vmatpush.xpose.msra.mxu0 %v231
      %274 = vmatpush.xpose.msra.mxu0 %v230
      %275 = vmatpush.xpose.msra.mxu0 %v229
      %276 = vmatpush.xpose.msra.mxu0 %v228
      %277 = vmatmul.f32.gmra.mxu0 %v212
      %v278 = vpop.f32.mrf.mxu0
      %v279 = vadd.f32 0.0, %v278
      %280 = vmatmul.f32.gmra.mxu0 %v213
      %v281 = vpop.f32.mrf.mxu0
      %v282 = vadd.f32 0.0, %v281
      %283 = vmatmul.f32.gmra.mxu0 %v214
      %v284 = vpop.f32.mrf.mxu0
      %v285 = vadd.f32 0.0, %v284
      %286 = vmatmul.f32.gmra.mxu0 %v215
      %v287 = vpop.f32.mrf.mxu0
      %v288 = vadd.f32 0.0, %v287
      %289 = vmatmul.f32.gmra.mxu0 %v216
      %v290 = vpop.f32.mrf.mxu0
      %v291 = vadd.f32 0.0, %v290
      %292 = vmatmul.f32.gmra.mxu0 %v217
      %v293 = vpop.f32.mrf.mxu0
      %v294 = vadd.f32 0.0, %v293
      %295 = vmatmul.f32.gmra.mxu0 %v218
      %v296 = vpop.f32.mrf.mxu0
      %v297 = vadd.f32 0.0, %v296
      %298 = vmatmul.f32.gmra.mxu0 %v219
      %v299 = vpop.f32.mrf.mxu0
      %v300 = vadd.f32 0.0, %v299
      %301 = vmatmul.f32.gmra.mxu0 %v220
      %v302 = vpop.f32.mrf.mxu0
      %v303 = vadd.f32 0.0, %v302
      %304 = vmatmul.f32.gmra.mxu0 %v221
      %v305 = vpop.f32.mrf.mxu0
      %v306 = vadd.f32 0.0, %v305
      %307 = vmatmul.f32.gmra.mxu0 %v222
      %v308 = vpop.f32.mrf.mxu0
      %v309 = vadd.f32 0.0, %v308
      %310 = vmatmul.f32.gmra.mxu0 %v223
      %v311 = vpop.f32.mrf.mxu0
      %v312 = vadd.f32 0.0, %v311
      %313 = vmatmul.f32.gmra.mxu0 %v224
      %v314 = vpop.f32.mrf.mxu0
      %v315 = vadd.f32 0.0, %v314
      %316 = vmatmul.f32.gmra.mxu0 %v225
      %v317 = vpop.f32.mrf.mxu0
      %v318 = vadd.f32 0.0, %v317
      %319 = vmatmul.f32.gmra.mxu0 %v226
      %v320 = vpop.f32.mrf.mxu0
      %v321 = vadd.f32 0.0, %v320
      %322 = vmatmul.f32.gmra.mxu0 %v227
      %v323 = vpop.f32.mrf.mxu0
      %v324 = vadd.f32 0.0, %v323
      %325 = vdwg.mxu0
      %326 = vmatpush.xpose.msra.mxu0 %v259
      %327 = vmatpush.xpose.msra.mxu0 %v258
      %328 = vmatpush.xpose.msra.mxu0 %v257
      %329 = vmatpush.xpose.msra.mxu0 %v256
      %330 = vmatpush.xpose.msra.mxu0 %v255
      %331 = vmatpush.xpose.msra.mxu0 %v254
      %332 = vmatpush.xpose.msra.mxu0 %v253
      %333 = vmatpush.xpose.msra.mxu0 %v252
      %334 = vmatpush.xpose.msra.mxu0 %v251
      %335 = vmatpush.xpose.msra.mxu0 %v250
      %336 = vmatpush.xpose.msra.mxu0 %v249
      %337 = vmatpush.xpose.msra.mxu0 %v248
      %338 = vmatpush.xpose.msra.mxu0 %v247
      %339 = vmatpush.xpose.msra.mxu0 %v246
      %340 = vmatpush.xpose.msra.mxu0 %v245
      %341 = vmatpush.xpose.msra.mxu0 %v244
      %342 = vmatmul.f32.gmra.mxu0 %v212
      %v343 = vpop.f32.mrf.mxu0
      %v344 = vadd.f32 0.0, %v343
      %345 = vmatmul.f32.gmra.mxu0 %v213
      %v346 = vpop.f32.mrf.mxu0
      %v347 = vadd.f32 0.0, %v346
      %348 = vmatmul.f32.gmra.mxu0 %v214
      %v349 = vpop.f32.mrf.mxu0
      %v350 = vadd.f32 0.0, %v349
      %351 = vmatmul.f32.gmra.mxu0 %v215
      %v352 = vpop.f32.mrf.mxu0
      %v353 = vadd.f32 0.0, %v352
      %354 = vmatmul.f32.gmra.mxu0 %v216
      %v355 = vpop.f32.mrf.mxu0
      %v356 = vadd.f32 0.0, %v355
      %357 = vmatmul.f32.gmra.mxu0 %v217
      %v358 = vpop.f32.mrf.mxu0
      %v359 = vadd.f32 0.0, %v358
      %360 = vmatmul.f32.gmra.mxu0 %v218
      %v361 = vpop.f32.mrf.mxu0
      %v362 = vadd.f32 0.0, %v361
      %363 = vmatmul.f32.gmra.mxu0 %v219
      %v364 = vpop.f32.mrf.mxu0
      %v365 = vadd.f32 0.0, %v364
      %366 = vmatmul.f32.gmra.mxu0 %v220
      %v367 = vpop.f32.mrf.mxu0
      %v368 = vadd.f32 0.0, %v367
      %369 = vmatmul.f32.gmra.mxu0 %v221
      %v370 = vpop.f32.mrf.mxu0
      %v371 = vadd.f32 0.0, %v370
      %372 = vmatmul.f32.gmra.mxu0 %v222
      %v373 = vpop.f32.mrf.mxu0
      %v374 = vadd.f32 0.0, %v373
      %375 = vmatmul.f32.gmra.mxu0 %v223
      %v376 = vpop.f32.mrf.mxu0
      %v377 = vadd.f32 0.0, %v376
      %378 = vmatmul.f32.gmra.mxu0 %v224
      %v379 = vpop.f32.mrf.mxu0
      %v380 = vadd.f32 0.0, %v379
      %381 = vmatmul.f32.gmra.mxu0 %v225
      %v382 = vpop.f32.mrf.mxu0
      %v383 = vadd.f32 0.0, %v382
      %384 = vmatmul.f32.gmra.mxu0 %v226
      %v385 = vpop.f32.mrf.mxu0
      %v386 = vadd.f32 0.0, %v385
      %387 = vmatmul.f32.gmra.mxu0 %v227
      %v388 = vpop.f32.mrf.mxu0
      %v389 = vadd.f32 0.0, %v388
      %390 = vdwg.mxu0
      %v391 = vmul.f32 %v279, 2.0
      %v392 = vmul.f32 %v344, 2.0
      %v393 = vmul.f32 %v282, 2.0
      %v394 = vmul.f32 %v347, 2.0
      %v395 = vmul.f32 %v285, 2.0
      %v396 = vmul.f32 %v350, 2.0
      %v397 = vmul.f32 %v288, 2.0
      %v398 = vmul.f32 %v353, 2.0
      %v399 = vmul.f32 %v291, 2.0
      %v400 = vmul.f32 %v356, 2.0
      %v401 = vmul.f32 %v294, 2.0
      %v402 = vmul.f32 %v359, 2.0
      %v403 = vmul.f32 %v297, 2.0
      %v404 = vmul.f32 %v362, 2.0
      %v405 = vmul.f32 %v300, 2.0
      %v406 = vmul.f32 %v365, 2.0
      %v407 = vmul.f32 %v303, 2.0
      %v408 = vmul.f32 %v368, 2.0
      %v409 = vmul.f32 %v306, 2.0
      %v410 = vmul.f32 %v371, 2.0
      %v411 = vmul.f32 %v309, 2.0
      %v412 = vmul.f32 %v374, 2.0
      %v413 = vmul.f32 %v312, 2.0
      %v414 = vmul.f32 %v377, 2.0
      %v415 = vmul.f32 %v315, 2.0
      %v416 = vmul.f32 %v380, 2.0
      %v417 = vmul.f32 %v318, 2.0
      %v418 = vmul.f32 %v383, 2.0
      %v419 = vmul.f32 %v321, 2.0
      %v420 = vmul.f32 %v386, 2.0
      %v421 = vmul.f32 %v324, 2.0
      %v422 = vmul.f32 %v389, 2.0
      %v424 = vperm.slane %v260, 0
      %v425 = vperm.slane %v260, 1
      %v428 = vsub.f32 %v424, %v391
      %v429 = vsub.f32 %v425, %v392
      %v430 = vsub.f32 %v424, %v393
      %v431 = vsub.f32 %v425, %v394
      %v432 = vsub.f32 %v424, %v395
      %v433 = vsub.f32 %v425, %v396
      %v434 = vsub.f32 %v424, %v397
      %v435 = vsub.f32 %v425, %v398
      %v436 = vsub.f32 %v424, %v399
      %v437 = vsub.f32 %v425, %v400
      %v438 = vsub.f32 %v424, %v401
      %v439 = vsub.f32 %v425, %v402
      %v440 = vsub.f32 %v424, %v403
      %v441 = vsub.f32 %v425, %v404
      %v442 = vsub.f32 %v424, %v405
      %v443 = vsub.f32 %v425, %v406
      %v444 = vsub.f32 %v424, %v407
      %v445 = vsub.f32 %v425, %v408
      %v446 = vsub.f32 %v424, %v409
      %v447 = vsub.f32 %v425, %v410
      %v448 = vsub.f32 %v424, %v411
      %v449 = vsub.f32 %v425, %v412
      %v450 = vsub.f32 %v424, %v413
      %v451 = vsub.f32 %v425, %v414
      %v452 = vsub.f32 %v424, %v415
      %v453 = vsub.f32 %v425, %v416
      %v454 = vsub.f32 %v424, %v417
      %v455 = vsub.f32 %v425, %v418
      %v456 = vsub.f32 %v424, %v419
      %v457 = vsub.f32 %v425, %v420
      %v458 = vsub.f32 %v424, %v421
      %v459 = vsub.f32 %v425, %v422
      %v460 = vlaneseq
      %v461 = vand.u32 %v460, 127
      %v462 = vadd.s32 %v461, 128
      %vm463 = vcmp.le.f32.partialorder %v428, %v429
      %v464 = vsel %vm463, %v428, %v429
      %v465 = vsel %vm463, %v461, %v462
      %466 = vmin.index.xlane.f32.xlu0 %v464
      %v467 = vpop.xlane.xlu0 %466
      %468 = vset.pattern.permute.xlu0 %v467
      %469 = vperm.xlu0 %468, %v465
      %v470 = vpop.permute.xlu0 %469
      %vm471 = vcmp.le.f32.partialorder %v430, %v431
      %v472 = vsel %vm471, %v430, %v431
      %v473 = vsel %vm471, %v461, %v462
      %474 = vmin.index.xlane.f32.xlu0 %v472
      %v475 = vpop.xlane.xlu0 %474
      %476 = vset.pattern.permute.xlu0 %v475
      %477 = vperm.xlu0 %476, %v473
      %v478 = vpop.permute.xlu0 %477
      %vm479 = vcmp.le.f32.partialorder %v432, %v433
      %v480 = vsel %vm479, %v432, %v433
      %v481 = vsel %vm479, %v461, %v462
      %482 = vmin.index.xlane.f32.xlu0 %v480
      %v483 = vpop.xlane.xlu0 %482
      %484 = vset.pattern.permute.xlu0 %v483
      %485 = vperm.xlu0 %484, %v481
      %v486 = vpop.permute.xlu0 %485
      %vm487 = vcmp.le.f32.partialorder %v434, %v435
      %v488 = vsel %vm487, %v434, %v435
      %v489 = vsel %vm487, %v461, %v462
      %490 = vmin.index.xlane.f32.xlu0 %v488
      %v491 = vpop.xlane.xlu0 %490
      %492 = vset.pattern.permute.xlu0 %v491
      %493 = vperm.xlu0 %492, %v489
      %v494 = vpop.permute.xlu0 %493
      %vm495 = vcmp.le.f32.partialorder %v436, %v437
      %v496 = vsel %vm495, %v436, %v437
      %v497 = vsel %vm495, %v461, %v462
      %498 = vmin.index.xlane.f32.xlu0 %v496
      %v499 = vpop.xlane.xlu0 %498
      %500 = vset.pattern.permute.xlu0 %v499
      %501 = vperm.xlu0 %500, %v497
      %v502 = vpop.permute.xlu0 %501
      %vm503 = vcmp.le.f32.partialorder %v438, %v439
      %v504 = vsel %vm503, %v438, %v439
      %v505 = vsel %vm503, %v461, %v462
      %506 = vmin.index.xlane.f32.xlu0 %v504
      %v507 = vpop.xlane.xlu0 %506
      %508 = vset.pattern.permute.xlu0 %v507
      %509 = vperm.xlu0 %508, %v505
      %v510 = vpop.permute.xlu0 %509
      %vm511 = vcmp.le.f32.partialorder %v440, %v441
      %v512 = vsel %vm511, %v440, %v441
      %v513 = vsel %vm511, %v461, %v462
      %514 = vmin.index.xlane.f32.xlu0 %v512
      %v515 = vpop.xlane.xlu0 %514
      %516 = vset.pattern.permute.xlu0 %v515
      %517 = vperm.xlu0 %516, %v513
      %v518 = vpop.permute.xlu0 %517
      %vm519 = vcmp.le.f32.partialorder %v442, %v443
      %v520 = vsel %vm519, %v442, %v443
      %v521 = vsel %vm519, %v461, %v462
      %522 = vmin.index.xlane.f32.xlu0 %v520
      %v523 = vpop.xlane.xlu0 %522
      %524 = vset.pattern.permute.xlu0 %v523
      %525 = vperm.xlu0 %524, %v521
      %v526 = vpop.permute.xlu0 %525
      %vm527 = vcmp.le.f32.partialorder %v444, %v445
      %v528 = vsel %vm527, %v444, %v445
      %v529 = vsel %vm527, %v461, %v462
      %530 = vmin.index.xlane.f32.xlu0 %v528
      %v531 = vpop.xlane.xlu0 %530
      %532 = vset.pattern.permute.xlu0 %v531
      %533 = vperm.xlu0 %532, %v529
      %v534 = vpop.permute.xlu0 %533
      %vm535 = vcmp.le.f32.partialorder %v446, %v447
      %v536 = vsel %vm535, %v446, %v447
      %v537 = vsel %vm535, %v461, %v462
      %538 = vmin.index.xlane.f32.xlu0 %v536
      %v539 = vpop.xlane.xlu0 %538
      %540 = vset.pattern.permute.xlu0 %v539
      %541 = vperm.xlu0 %540, %v537
      %v542 = vpop.permute.xlu0 %541
      %vm543 = vcmp.le.f32.partialorder %v448, %v449
      %v544 = vsel %vm543, %v448, %v449
      %v545 = vsel %vm543, %v461, %v462
      %546 = vmin.index.xlane.f32.xlu0 %v544
      %v547 = vpop.xlane.xlu0 %546
      %548 = vset.pattern.permute.xlu0 %v547
      %549 = vperm.xlu0 %548, %v545
      %v550 = vpop.permute.xlu0 %549
      %vm551 = vcmp.le.f32.partialorder %v450, %v451
      %v552 = vsel %vm551, %v450, %v451
      %v553 = vsel %vm551, %v461, %v462
      %554 = vmin.index.xlane.f32.xlu0 %v552
      %v555 = vpop.xlane.xlu0 %554
      %556 = vset.pattern.permute.xlu0 %v555
      %557 = vperm.xlu0 %556, %v553
      %v558 = vpop.permute.xlu0 %557
      %vm559 = vcmp.le.f32.partialorder %v452, %v453
      %v560 = vsel %vm559, %v452, %v453
      %v561 = vsel %vm559, %v461, %v462
      %562 = vmin.index.xlane.f32.xlu0 %v560
      %v563 = vpop.xlane.xlu0 %562
      %564 = vset.pattern.permute.xlu0 %v563
      %565 = vperm.xlu0 %564, %v561
      %v566 = vpop.permute.xlu0 %565
      %vm567 = vcmp.le.f32.partialorder %v454, %v455
      %v568 = vsel %vm567, %v454, %v455
      %v569 = vsel %vm567, %v461, %v462
      %570 = vmin.index.xlane.f32.xlu0 %v568
      %v571 = vpop.xlane.xlu0 %570
      %572 = vset.pattern.permute.xlu0 %v571
      %573 = vperm.xlu0 %572, %v569
      %v574 = vpop.permute.xlu0 %573
      %vm575 = vcmp.le.f32.partialorder %v456, %v457
      %v576 = vsel %vm575, %v456, %v457
      %v577 = vsel %vm575, %v461, %v462
      %578 = vmin.index.xlane.f32.xlu0 %v576
      %v579 = vpop.xlane.xlu0 %578
      %580 = vset.pattern.permute.xlu0 %v579
      %581 = vperm.xlu0 %580, %v577
      %v582 = vpop.permute.xlu0 %581
      %vm583 = vcmp.le.f32.partialorder %v458, %v459
      %v584 = vsel %vm583, %v458, %v459
      %v585 = vsel %vm583, %v461, %v462
      %586 = vmin.index.xlane.f32.xlu0 %v584
      %v587 = vpop.xlane.xlu0 %586
      %588 = vset.pattern.permute.xlu0 %v587
      %589 = vperm.xlu0 %588, %v585
      %v590 = vpop.permute.xlu0 %589
      %vm591 = vcmp.eq.s32.totalorder %v461, %v470
      %vm592 = vcmp.eq.s32.totalorder %v462, %v470
      %vm593 = vcmp.eq.s32.totalorder %v461, %v478
      %vm594 = vcmp.eq.s32.totalorder %v462, %v478
      %vm595 = vcmp.eq.s32.totalorder %v461, %v486
      %vm596 = vcmp.eq.s32.totalorder %v462, %v486
      %vm597 = vcmp.eq.s32.totalorder %v461, %v494
      %vm598 = vcmp.eq.s32.totalorder %v462, %v494
      %vm599 = vcmp.eq.s32.totalorder %v461, %v502
      %vm600 = vcmp.eq.s32.totalorder %v462, %v502
      %vm601 = vcmp.eq.s32.totalorder %v461, %v510
      %vm602 = vcmp.eq.s32.totalorder %v462, %v510
      %vm603 = vcmp.eq.s32.totalorder %v461, %v518
      %vm604 = vcmp.eq.s32.totalorder %v462, %v518
      %vm605 = vcmp.eq.s32.totalorder %v461, %v526
      %vm606 = vcmp.eq.s32.totalorder %v462, %v526
      %vm607 = vcmp.eq.s32.totalorder %v461, %v534
      %vm608 = vcmp.eq.s32.totalorder %v462, %v534
      %vm609 = vcmp.eq.s32.totalorder %v461, %v542
      %vm610 = vcmp.eq.s32.totalorder %v462, %v542
      %vm611 = vcmp.eq.s32.totalorder %v461, %v550
      %vm612 = vcmp.eq.s32.totalorder %v462, %v550
      %vm613 = vcmp.eq.s32.totalorder %v461, %v558
      %vm614 = vcmp.eq.s32.totalorder %v462, %v558
      %vm615 = vcmp.eq.s32.totalorder %v461, %v566
      %vm616 = vcmp.eq.s32.totalorder %v462, %v566
      %vm617 = vcmp.eq.s32.totalorder %v461, %v574
      %vm618 = vcmp.eq.s32.totalorder %v462, %v574
      %vm619 = vcmp.eq.s32.totalorder %v461, %v582
      %vm620 = vcmp.eq.s32.totalorder %v462, %v582
      %vm621 = vcmp.eq.s32.totalorder %v461, %v590
      %vm622 = vcmp.eq.s32.totalorder %v462, %v590
      %v623 = vsel %vm591, 1, 0
      %v624 = vsel %vm592, 1, 0
      %v625 = vsel %vm593, 1, 0
      %v626 = vsel %vm594, 1, 0
      %v627 = vsel %vm595, 1, 0
      %v628 = vsel %vm596, 1, 0
      %v629 = vsel %vm597, 1, 0
      %v630 = vsel %vm598, 1, 0
      %v631 = vsel %vm599, 1, 0
      %v632 = vsel %vm600, 1, 0
      %v633 = vsel %vm601, 1, 0
      %v634 = vsel %vm602, 1, 0
      %v635 = vsel %vm603, 1, 0
      %v636 = vsel %vm604, 1, 0
      %v637 = vsel %vm605, 1, 0
      %v638 = vsel %vm606, 1, 0
      %v639 = vsel %vm607, 1, 0
      %v640 = vsel %vm608, 1, 0
      %v641 = vsel %vm609, 1, 0
      %v642 = vsel %vm610, 1, 0
      %v643 = vsel %vm611, 1, 0
      %v644 = vsel %vm612, 1, 0
      %v645 = vsel %vm613, 1, 0
      %v646 = vsel %vm614, 1, 0
      %v647 = vsel %vm615, 1, 0
      %v648 = vsel %vm616, 1, 0
      %v649 = vsel %vm617, 1, 0
      %v650 = vsel %vm618, 1, 0
      %v651 = vsel %vm619, 1, 0
      %v652 = vsel %vm620, 1, 0
      %v653 = vsel %vm621, 1, 0
      %v654 = vsel %vm622, 1, 0
      %v655 = vcvt.s32.f32 %v623
      %v656 = vcvt.s32.f32 %v624
      %v657 = vcvt.s32.f32 %v625
      %v658 = vcvt.s32.f32 %v626
      %v659 = vcvt.s32.f32 %v627
      %v660 = vcvt.s32.f32 %v628
      %v661 = vcvt.s32.f32 %v629
      %v662 = vcvt.s32.f32 %v630
      %v663 = vcvt.s32.f32 %v631
      %v664 = vcvt.s32.f32 %v632
      %v665 = vcvt.s32.f32 %v633
      %v666 = vcvt.s32.f32 %v634
      %v667 = vcvt.s32.f32 %v635
      %v668 = vcvt.s32.f32 %v636
      %v669 = vcvt.s32.f32 %v637
      %v670 = vcvt.s32.f32 %v638
      %v671 = vcvt.s32.f32 %v639
      %v672 = vcvt.s32.f32 %v640
      %v673 = vcvt.s32.f32 %v641
      %v674 = vcvt.s32.f32 %v642
      %v675 = vcvt.s32.f32 %v643
      %v676 = vcvt.s32.f32 %v644
      %v677 = vcvt.s32.f32 %v645
      %v678 = vcvt.s32.f32 %v646
      %v679 = vcvt.s32.f32 %v647
      %v680 = vcvt.s32.f32 %v648
      %v681 = vcvt.s32.f32 %v649
      %v682 = vcvt.s32.f32 %v650
      %v683 = vcvt.s32.f32 %v651
      %v684 = vcvt.s32.f32 %v652
      %v685 = vcvt.s32.f32 %v653
      %v686 = vcvt.s32.f32 %v654
      %687 = vmatpush.msra.mxu0 %v243
      %688 = vmatpush.msra.mxu0 %v242
      %689 = vmatpush.msra.mxu0 %v241
      %690 = vmatpush.msra.mxu0 %v240
      %691 = vmatpush.msra.mxu0 %v239
      %692 = vmatpush.msra.mxu0 %v238
      %693 = vmatpush.msra.mxu0 %v237
      %694 = vmatpush.msra.mxu0 %v236
      %695 = vmatpush.msra.mxu0 %v235
      %696 = vmatpush.msra.mxu0 %v234
      %697 = vmatpush.msra.mxu0 %v233
      %698 = vmatpush.msra.mxu0 %v232
      %699 = vmatpush.msra.mxu0 %v231
      %700 = vmatpush.msra.mxu0 %v230
      %701 = vmatpush.msra.mxu0 %v229
      %702 = vmatpush.msra.mxu0 %v228
      %703 = vmatmul.f32.gmra.mxu0 %v655
      %v704 = vpop.f32.mrf.mxu0
      %v705 = vadd.f32 0.0, %v704
      %706 = vmatmul.f32.gmra.mxu0 %v657
      %v707 = vpop.f32.mrf.mxu0
      %v708 = vadd.f32 0.0, %v707
      %709 = vmatmul.f32.gmra.mxu0 %v659
      %v710 = vpop.f32.mrf.mxu0
      %v711 = vadd.f32 0.0, %v710
      %712 = vmatmul.f32.gmra.mxu0 %v661
      %v713 = vpop.f32.mrf.mxu0
      %v714 = vadd.f32 0.0, %v713
      %715 = vmatmul.f32.gmra.mxu0 %v663
      %v716 = vpop.f32.mrf.mxu0
      %v717 = vadd.f32 0.0, %v716
      %718 = vmatmul.f32.gmra.mxu0 %v665
      %v719 = vpop.f32.mrf.mxu0
      %v720 = vadd.f32 0.0, %v719
      %721 = vmatmul.f32.gmra.mxu0 %v667
      %v722 = vpop.f32.mrf.mxu0
      %v723 = vadd.f32 0.0, %v722
      %724 = vmatmul.f32.gmra.mxu0 %v669
      %v725 = vpop.f32.mrf.mxu0
      %v726 = vadd.f32 0.0, %v725
      %727 = vmatmul.f32.gmra.mxu0 %v671
      %v728 = vpop.f32.mrf.mxu0
      %v729 = vadd.f32 0.0, %v728
      %730 = vmatmul.f32.gmra.mxu0 %v673
      %v731 = vpop.f32.mrf.mxu0
      %v732 = vadd.f32 0.0, %v731
      %733 = vmatmul.f32.gmra.mxu0 %v675
      %v734 = vpop.f32.mrf.mxu0
      %v735 = vadd.f32 0.0, %v734
      %736 = vmatmul.f32.gmra.mxu0 %v677
      %v737 = vpop.f32.mrf.mxu0
      %v738 = vadd.f32 0.0, %v737
      %739 = vmatmul.f32.gmra.mxu0 %v679
      %v740 = vpop.f32.mrf.mxu0
      %v741 = vadd.f32 0.0, %v740
      %742 = vmatmul.f32.gmra.mxu0 %v681
      %v743 = vpop.f32.mrf.mxu0
      %v744 = vadd.f32 0.0, %v743
      %745 = vmatmul.f32.gmra.mxu0 %v683
      %v746 = vpop.f32.mrf.mxu0
      %v747 = vadd.f32 0.0, %v746
      %748 = vmatmul.f32.gmra.mxu0 %v685
      %v749 = vpop.f32.mrf.mxu0
      %v750 = vadd.f32 0.0, %v749
      %751 = vdwg.mxu0
      %752 = vmatpush.msra.mxu0 %v259
      %753 = vmatpush.msra.mxu0 %v258
      %754 = vmatpush.msra.mxu0 %v257
      %755 = vmatpush.msra.mxu0 %v256
      %756 = vmatpush.msra.mxu0 %v255
      %757 = vmatpush.msra.mxu0 %v254
      %758 = vmatpush.msra.mxu0 %v253
      %759 = vmatpush.msra.mxu0 %v252
      %760 = vmatpush.msra.mxu0 %v251
      %761 = vmatpush.msra.mxu0 %v250
      %762 = vmatpush.msra.mxu0 %v249
      %763 = vmatpush.msra.mxu0 %v248
      %764 = vmatpush.msra.mxu0 %v247
      %765 = vmatpush.msra.mxu0 %v246
      %766 = vmatpush.msra.mxu0 %v245
      %767 = vmatpush.msra.mxu0 %v244
      %768 = vmatmul.f32.gmra.mxu0 %v656
      %v769 = vpop.f32.mrf.mxu0
      %v770 = vadd.f32 %v705, %v769
      %771 = vmatmul.f32.gmra.mxu0 %v658
      %v772 = vpop.f32.mrf.mxu0
      %v773 = vadd.f32 %v708, %v772
      %774 = vmatmul.f32.gmra.mxu0 %v660
      %v775 = vpop.f32.mrf.mxu0
      %v776 = vadd.f32 %v711, %v775
      %777 = vmatmul.f32.gmra.mxu0 %v662
      %v778 = vpop.f32.mrf.mxu0
      %v779 = vadd.f32 %v714, %v778
      %780 = vmatmul.f32.gmra.mxu0 %v664
      %v781 = vpop.f32.mrf.mxu0
      %v782 = vadd.f32 %v717, %v781
      %783 = vmatmul.f32.gmra.mxu0 %v666
      %v784 = vpop.f32.mrf.mxu0
      %v785 = vadd.f32 %v720, %v784
      %786 = vmatmul.f32.gmra.mxu0 %v668
      %v787 = vpop.f32.mrf.mxu0
      %v788 = vadd.f32 %v723, %v787
      %789 = vmatmul.f32.gmra.mxu0 %v670
      %v790 = vpop.f32.mrf.mxu0
      %v791 = vadd.f32 %v726, %v790
      %792 = vmatmul.f32.gmra.mxu0 %v672
      %v793 = vpop.f32.mrf.mxu0
      %v794 = vadd.f32 %v729, %v793
      %795 = vmatmul.f32.gmra.mxu0 %v674
      %v796 = vpop.f32.mrf.mxu0
      %v797 = vadd.f32 %v732, %v796
      %798 = vmatmul.f32.gmra.mxu0 %v676
      %v799 = vpop.f32.mrf.mxu0
      %v800 = vadd.f32 %v735, %v799
      %801 = vmatmul.f32.gmra.mxu0 %v678
      %v802 = vpop.f32.mrf.mxu0
      %v803 = vadd.f32 %v738, %v802
      %804 = vmatmul.f32.gmra.mxu0 %v680
      %v805 = vpop.f32.mrf.mxu0
      %v806 = vadd.f32 %v741, %v805
      %807 = vmatmul.f32.gmra.mxu0 %v682
      %v808 = vpop.f32.mrf.mxu0
      %v809 = vadd.f32 %v744, %v808
      %810 = vmatmul.f32.gmra.mxu0 %v684
      %v811 = vpop.f32.mrf.mxu0
      %v812 = vadd.f32 %v747, %v811
      %813 = vmatmul.f32.gmra.mxu0 %v686
      %v814 = vpop.f32.mrf.mxu0
      %v815 = vadd.f32 %v750, %v814
      %816 = vdwg.mxu0
      %v817 = vsub.f32 %v770, %v212
      %v818 = vsub.f32 %v773, %v213
      %v819 = vsub.f32 %v776, %v214
      %v820 = vsub.f32 %v779, %v215
      %v821 = vsub.f32 %v782, %v216
      %v822 = vsub.f32 %v785, %v217
      %v823 = vsub.f32 %v788, %v218
      %v824 = vsub.f32 %v791, %v219
      %v825 = vsub.f32 %v794, %v220
      %v826 = vsub.f32 %v797, %v221
      %v827 = vsub.f32 %v800, %v222
      %v828 = vsub.f32 %v803, %v223
      %v829 = vsub.f32 %v806, %v224
      %v830 = vsub.f32 %v809, %v225
      %v831 = vsub.f32 %v812, %v226
      %v832 = vsub.f32 %v815, %v227
      %v833 = vadd.f32 %v212, %v817
      %v834 = vadd.f32 %v213, %v818
      %v835 = vadd.f32 %v214, %v819
      %v836 = vadd.f32 %v215, %v820
      %v837 = vadd.f32 %v216, %v821
      %v838 = vadd.f32 %v217, %v822
      %v839 = vadd.f32 %v218, %v823
      %v840 = vadd.f32 %v219, %v824
      %v841 = vadd.f32 %v220, %v825
      %v842 = vadd.f32 %v221, %v826
      %v843 = vadd.f32 %v222, %v827
      %v844 = vadd.f32 %v223, %v828
      %v845 = vadd.f32 %v224, %v829
      %v846 = vadd.f32 %v225, %v830
      %v847 = vadd.f32 %v226, %v831
      %v848 = vadd.f32 %v227, %v832
      %849 = vst [vmem:[%s206] sm:$0xff] %v833
      %850 = vst [vmem:[%s206 + $0x8] sm:$0xff] %v834
      %851 = vst [vmem:[%s206 + $0x10] sm:$0xff] %v835
      %852 = vst [vmem:[%s206 + $0x18] sm:$0xff] %v836
      %853 = vst [vmem:[%s206 + $0x20] sm:$0xff] %v837
      %854 = vst [vmem:[%s206 + $0x28] sm:$0xff] %v838
      %855 = vst [vmem:[%s206 + $0x30] sm:$0xff] %v839
      %856 = vst [vmem:[%s206 + $0x38] sm:$0xff] %v840
      %857 = vst [vmem:[%s206 + $0x40] sm:$0xff] %v841
      %858 = vst [vmem:[%s206 + $0x48] sm:$0xff] %v842
      %859 = vst [vmem:[%s206 + $0x50] sm:$0xff] %v843
      %860 = vst [vmem:[%s206 + $0x58] sm:$0xff] %v844
      %861 = vst [vmem:[%s206 + $0x60] sm:$0xff] %v845
      %862 = vst [vmem:[%s206 + $0x68] sm:$0xff] %v846
      %863 = vst [vmem:[%s206 + $0x70] sm:$0xff] %v847
      %864 = vst [vmem:[%s206 + $0x78] sm:$0xff] %v848
      %s865 = smul.u32 %s16, 128
      %v866 = vlaneseq
      %v867 = vshrl.u32 %v866, 7
      %v868 = vadd.s32 %v867, 8
      %v869 = vadd.s32 %v867, 16
      %v870 = vadd.s32 %v867, 24
      %v871 = vadd.s32 %v867, 32
      %v872 = vadd.s32 %v867, 40
      %v873 = vadd.s32 %v867, 48
      %v874 = vadd.s32 %v867, 56
      %v875 = vadd.s32 %v867, 64
      %v876 = vadd.s32 %v867, 72
      %v877 = vadd.s32 %v867, 80
      %v878 = vadd.s32 %v867, 88
      %v879 = vadd.s32 %v867, 96
      %v880 = vadd.s32 %v867, 104
      %v881 = vadd.s32 %v867, 112
      %v882 = vadd.s32 %v867, 120
      %v883 = vstv %s865
      %v884 = vadd.s32 %v883, %v867
      %v885 = vadd.s32 %v883, %v868
      %v886 = vadd.s32 %v883, %v869
      %v887 = vadd.s32 %v883, %v870
      %v888 = vadd.s32 %v883, %v871
      %v889 = vadd.s32 %v883, %v872
      %v890 = vadd.s32 %v883, %v873
      %v891 = vadd.s32 %v883, %v874
      %v892 = vadd.s32 %v883, %v875
      %v893 = vadd.s32 %v883, %v876
      %v894 = vadd.s32 %v883, %v877
      %v895 = vadd.s32 %v883, %v878
      %v896 = vadd.s32 %v883, %v879
      %v897 = vadd.s32 %v883, %v880
      %v898 = vadd.s32 %v883, %v881
      %v899 = vadd.s32 %v883, %v882
      %vm900 = vcmp.lt.s32.totalorder %v884, 320
      %vm901 = vcmp.lt.s32.totalorder %v885, 320
      %vm902 = vcmp.lt.s32.totalorder %v886, 320
      %vm903 = vcmp.lt.s32.totalorder %v887, 320
      %vm904 = vcmp.lt.s32.totalorder %v888, 320
      %vm905 = vcmp.lt.s32.totalorder %v889, 320
      %vm906 = vcmp.lt.s32.totalorder %v890, 320
      %vm907 = vcmp.lt.s32.totalorder %v891, 320
      %vm908 = vcmp.lt.s32.totalorder %v892, 320
      %vm909 = vcmp.lt.s32.totalorder %v893, 320
      %vm910 = vcmp.lt.s32.totalorder %v894, 320
      %vm911 = vcmp.lt.s32.totalorder %v895, 320
      %vm912 = vcmp.lt.s32.totalorder %v896, 320
      %vm913 = vcmp.lt.s32.totalorder %v897, 320
      %vm914 = vcmp.lt.s32.totalorder %v898, 320
      %vm915 = vcmp.lt.s32.totalorder %v899, 320
      %v916 = vsel %vm900, 1, 0
      %v917 = vsel %vm901, 1, 0
      %v918 = vsel %vm902, 1, 0
      %v919 = vsel %vm903, 1, 0
      %v920 = vsel %vm904, 1, 0
      %v921 = vsel %vm905, 1, 0
      %v922 = vsel %vm906, 1, 0
      %v923 = vsel %vm907, 1, 0
      %v924 = vsel %vm908, 1, 0
      %v925 = vsel %vm909, 1, 0
      %v926 = vsel %vm910, 1, 0
      %v927 = vsel %vm911, 1, 0
      %v928 = vsel %vm912, 1, 0
      %v929 = vsel %vm913, 1, 0
      %v930 = vsel %vm914, 1, 0
      %v931 = vsel %vm915, 1, 0
      %vm932 = vcmp.eq.s32.totalorder %v916, 1
      %vm933 = vcmp.eq.s32.totalorder %v917, 1
      %vm934 = vcmp.eq.s32.totalorder %v918, 1
      %vm935 = vcmp.eq.s32.totalorder %v919, 1
      %vm936 = vcmp.eq.s32.totalorder %v920, 1
      %vm937 = vcmp.eq.s32.totalorder %v921, 1
      %vm938 = vcmp.eq.s32.totalorder %v922, 1
      %vm939 = vcmp.eq.s32.totalorder %v923, 1
      %vm940 = vcmp.eq.s32.totalorder %v924, 1
      %vm941 = vcmp.eq.s32.totalorder %v925, 1
      %vm942 = vcmp.eq.s32.totalorder %v926, 1
      %vm943 = vcmp.eq.s32.totalorder %v927, 1
      %vm944 = vcmp.eq.s32.totalorder %v928, 1
      %vm945 = vcmp.eq.s32.totalorder %v929, 1
      %vm946 = vcmp.eq.s32.totalorder %v930, 1
      %vm947 = vcmp.eq.s32.totalorder %v931, 1
      %v948 = vsel %vm932, %v655, 0.0
      %v949 = vsel %vm932, %v656, 0.0
      %v950 = vsel %vm933, %v657, 0.0
      %v951 = vsel %vm933, %v658, 0.0
      %v952 = vsel %vm934, %v659, 0.0
      %v953 = vsel %vm934, %v660, 0.0
      %v954 = vsel %vm935, %v661, 0.0
      %v955 = vsel %vm935, %v662, 0.0
      %v956 = vsel %vm936, %v663, 0.0
      %v957 = vsel %vm936, %v664, 0.0
      %v958 = vsel %vm937, %v665, 0.0
      %v959 = vsel %vm937, %v666, 0.0
      %v960 = vsel %vm938, %v667, 0.0
      %v961 = vsel %vm938, %v668, 0.0
      %v962 = vsel %vm939, %v669, 0.0
      %v963 = vsel %vm939, %v670, 0.0
      %v964 = vsel %vm940, %v671, 0.0
      %v965 = vsel %vm940, %v672, 0.0
      %v966 = vsel %vm941, %v673, 0.0
      %v967 = vsel %vm941, %v674, 0.0
      %v968 = vsel %vm942, %v675, 0.0
      %v969 = vsel %vm942, %v676, 0.0
      %v970 = vsel %vm943, %v677, 0.0
      %v971 = vsel %vm943, %v678, 0.0
      %v972 = vsel %vm944, %v679, 0.0
      %v973 = vsel %vm944, %v680, 0.0
      %v974 = vsel %vm945, %v681, 0.0
      %v975 = vsel %vm945, %v682, 0.0
      %v976 = vsel %vm946, %v683, 0.0
      %v977 = vsel %vm946, %v684, 0.0
      %v978 = vsel %vm947, %v685, 0.0
      %v979 = vsel %vm947, %v686, 0.0
      %v980 = vadd.f32 %v948, %v950
      %v981 = vadd.f32 %v980, %v952
      %v982 = vadd.f32 %v981, %v954
      %v983 = vadd.f32 %v982, %v956
      %v984 = vadd.f32 %v983, %v958
      %v985 = vadd.f32 %v984, %v960
      %v986 = vadd.f32 %v985, %v962
      %v987 = vadd.f32 %v986, %v964
      %v988 = vadd.f32 %v987, %v966
      %v989 = vadd.f32 %v988, %v968
      %v990 = vadd.f32 %v989, %v970
      %v991 = vadd.f32 %v990, %v972
      %v992 = vadd.f32 %v991, %v974
      %v993 = vadd.f32 %v992, %v976
      %v994 = vadd.f32 %v993, %v978
      %v995 = vrot.slane %v994, 4
      %v996 = vadd.f32 %v994, %v995
      %v997 = vrot.slane %v996, 2
      %v998 = vadd.f32 %v996, %v997
      %v999 = vrot.slane %v998, 1
      %v1000 = vadd.f32 %v998, %v999
      %v1001 = vadd.f32 %v949, %v951
      %v1002 = vadd.f32 %v1001, %v953
      %v1003 = vadd.f32 %v1002, %v955
      %v1004 = vadd.f32 %v1003, %v957
      %v1005 = vadd.f32 %v1004, %v959
      %v1006 = vadd.f32 %v1005, %v961
      %v1007 = vadd.f32 %v1006, %v963
      %v1008 = vadd.f32 %v1007, %v965
      %v1009 = vadd.f32 %v1008, %v967
      %v1010 = vadd.f32 %v1009, %v969
      %v1011 = vadd.f32 %v1010, %v971
      %v1012 = vadd.f32 %v1011, %v973
      %v1013 = vadd.f32 %v1012, %v975
      %v1014 = vadd.f32 %v1013, %v977
      %v1015 = vadd.f32 %v1014, %v979
      %v1016 = vrot.slane %v1015, 4
      %v1017 = vadd.f32 %v1015, %v1016
      %v1018 = vrot.slane %v1017, 2
      %v1019 = vadd.f32 %v1017, %v1018
      %v1020 = vrot.slane %v1019, 1
      %v1021 = vadd.f32 %v1019, %v1020
      %v1024 = vrot.slane %v1021, 7
      %vm1025 = vcmask 1040384
      %v1026 = vsel %vm1025, %v1000, %v1024
      %v1028 = vlaneseq
      %vm1029 = vcmp.ge.s32.totalorder %v1028, 0
      %vm1030 = vcmp.lt.s32.totalorder %v1028, 256
      %vm1031 = vmand %vm1029, %vm1030
      %1032 = vst.msk [vmem:[%s211] sm:$0x3] %vm1031, %v1026
      %s1033 = smul.u32 16, %s16
      %p1034 = scmp.lt.s32.totalorder %s1033, 47
      %s1035 = scalar_select %p1034, %s1033, 47
      %s1036 = smul.addr %s1035, 8
      %s1037 = scalar_lea.vmem %s3, %s1036
      %p1038 = scmp.lt.s32.totalorder %s16, 2
      %s1039 = scalar_select %p1038, %s16, 2
      %s1040 = smul.addr %s1039, 2
      %s1041 = scalar_lea.vmem %s4, %s1040
      // Predicated region
      $region33: #{vector_quantizer_forward.1} parent=31 // pred_check
        %p1042 = pneg %p102
      $region34: #{vector_quantizer_forward.1} parent=31 // pred_check_branch
        %1044 = sbr.rel (%p1042) target = $region36
      $region35: #{vector_quantizer_forward.1} parent=31 // pred_region
        %s1045 = smul.u32 16, %s16
      $region36: #{vector_quantizer_forward.1} parent=31 // pred_fallthru
        _
      // Predicated region
      $region37: #{vector_quantizer_forward.1} parent=31 // pred_check
        %p1046 = pneg %p128
      $region38: #{vector_quantizer_forward.1} parent=31 // pred_check_branch
        %1048 = sbr.rel (%p1046) target = $region40
      $region39: #{vector_quantizer_forward.1} parent=31 // pred_region
        _
      $region40: #{vector_quantizer_forward.1} parent=31 // pred_fallthru
        _
    $region32: #{vector_quantizer_forward.1} parent=5 // pred_fallthru
      _
    %p1049 = scmp.le.s32.totalorder 2, %s11
    // Predicated region
    $region41: #{vector_quantizer_forward.1} parent=5 // pred_check
      %p1050 = pneg %p1049
    $region42: #{vector_quantizer_forward.1} parent=5 // pred_check_branch
      %1052 = sbr.rel (%p1050) target = $region44
    $region43: #{vector_quantizer_forward.1} parent=5 // pred_region
      %s1053 = ssub.s32 %s11, 2
      // Predicated region
      $region45: #{vector_quantizer_forward.1} parent=43 // pred_check
        %p1054 = pneg %p108
      $region46: #{vector_quantizer_forward.1} parent=43 // pred_check_branch
        %1056 = sbr.rel (%p1054) target = $region48
      $region47: #{vector_quantizer_forward.1} parent=43 // pred_region
        %s1057 = smul.u32 16, %s17
        %p1058 = scmp.lt.s32.totalorder %s1057, 47
        %s1059 = scalar_select %p1058, %s1057, 47
        %s1060 = smul.addr %s1059, 8
        %s1061 = scalar_lea.vmem %s3, %s1060
      $region48: #{vector_quantizer_forward.1} parent=43 // pred_fallthru
        _
      // Predicated region
      $region49: #{vector_quantizer_forward.1} parent=43 // pred_check
        %p1062 = pneg %p134
      $region50: #{vector_quantizer_forward.1} parent=43 // pred_check_branch
        %1064 = sbr.rel (%p1062) target = $region52
      $region51: #{vector_quantizer_forward.1} parent=43 // pred_region
        %p1065 = scmp.lt.s32.totalorder %s17, 2
        %s1066 = scalar_select %p1065, %s17, 2
        %s1067 = smul.addr %s1066, 2
        %s1068 = scalar_lea.vmem %s4, %s1067
      $region52: #{vector_quantizer_forward.1} parent=43 // pred_fallthru
        _
    $region44: #{vector_quantizer_forward.1} parent=5 // pred_fallthru
      _
  $region6: #{vector_quantizer_forward.1} parent=0 // loop_footer
    %s15 = sadd.s32 1, %s11
  $region7: #{vector_quantizer_forward.1} parent=0 // loop_footer_branch
    %10 = sbr.rel target = $region3
  $region8: #{vector_quantizer_forward.1} parent=0 // loop_exit
    _

</llo_original>
